<compile_context>
chip_gen: v5e
topology: v5e:2x2
jax: 0.10.0
libtpu: 0.0.40
codegen_flags: <defaults>
</compile_context>

<pallas_src>
import functools

import jax
import jax.numpy as jnp
from jax.experimental import pallas as pl
from jax.experimental.pallas import tpu as pltpu

EPS = 1e-5
_LANE = 128


# ------------------------------ sizing helpers ------------------------------ #

def _vmem_budgets():
    """(vmem_limit_bytes, per-call block budget) derived from this chip's VMEM."""
    try:
        phys = int(pltpu.get_tpu_info().vmem_capacity_bytes)
    except Exception:
        phys = 64 * 1024 * 1024          # conservative fallback (v7x per-core size)
    # ~96 MiB / ~21 MiB on v5e+v6e (128 MiB VMEM), ~48 MiB / ~10 MiB on v7x (64 MiB).
    return (phys * 3) // 4, phys // 6


def _ceil_to(v, m):
    return ((v + m - 1) // m) * m


def _largest_divisor_tile(P, cap, gran):
    """Largest t with P % t == 0, t % gran == 0, t <= cap (0 if none exists)."""
    best, d = 0, 1
    while d * d <= P:
        if P % d == 0:
            for t in (d, P // d):
                if t % gran == 0 and t <= cap and t > best:
                    best = t
        d += 1
    return best


def _choose_tile_p(P, max_tp):
    """Return (tile_p, P_pad).  tile_p is a multiple of 128 (256 preferred for the
    256-wide v6e/v7x MXUs); P_pad = num_tiles * tile_p >= P (zero-padded tail)."""
    if max_tp >= P:
        tp = _ceil_to(P, _LANE)
        return tp, tp
    cap = (max_tp // _LANE) * _LANE
    for gran in (256, _LANE):
        best = _largest_divisor_tile(P, cap, gran)
        if best >= max(gran, cap // 2):          # exact divisor, big enough -> no pad
            return best, P
    gran = 256 if cap >= 256 else _LANE
    tp = (cap // gran) * gran
    return tp, _ceil_to(P, tp)


# ----------------------------- fused path (small P) ----------------------------- #

def _fused_kernel(a_ref, w_ref, b_ref, g_ref, beta_ref, o_ref, *, p_real, inv_n):
    # a_ref: (1, K, P_pad); w_ref: (C, K); b/g/beta: (C, 1); o_ref: (1, C, P_pad)
    a = a_ref[0]                                                    # (K, P_pad)
    # Flipped matmul: MXU output lane dim is P_pad (lane dense), no transpose needed.
    z = jnp.dot(w_ref[...], a, preferred_element_type=jnp.float32)  # (C, P_pad) f32

    # Per-(channel, lane) partial moments: pure VPU adds over 128-wide lane chunks.
    # Zero-padded P columns produce exactly z == 0, so they drop out of the stats.
    z2 = z * z
    u1 = z[:, :_LANE]
    u2 = z2[:, :_LANE]
    for j in range(1, z.shape[1] // _LANE):
        u1 = u1 + z[:, j * _LANE:(j + 1) * _LANE]
        u2 = u2 + z2[:, j * _LANE:(j + 1) * _LANE]

    b = b_ref[...]                                                  # (C, 1) f32
    r1 = jnp.sum(u1, axis=1, keepdims=True)                         # (C, 1) sum_p z
    r2 = jnp.sum(u2, axis=1, keepdims=True)                         # (C, 1) sum_p z^2
    mean = (jnp.sum(r1) + p_real * jnp.sum(b)) * inv_n
    d = b - mean
    # bias-shifted variance: avoids the worst E[y^2] - E[y]^2 cancellation when the
    # mean is dominated by the conv bias.
    var = jnp.sum(r2 + 2.0 * d * r1 + p_real * d * d) * inv_n
    inv_std = jax.lax.rsqrt(var + EPS)

    scale = inv_std * g_ref[...]                                    # (C, 1)
    shift = d * scale + beta_ref[...]                               # (C, 1)
    o_ref[0] = (z * scale + shift).astype(o_ref.dtype)


# --------------------------- tiled path, pass 1 (conv+moments) ------------------ #

def _conv_stats_kernel(a_ref, w_ref, y_ref, u1_ref, u2_ref):
    # a_ref: (1, K, tp); w_ref: (C, K); y_ref: (1, C, tp); u*_ref: (1, C, 128)
    a = a_ref[0]                                                    # (K, tp)
    z = jnp.dot(w_ref[...], a, preferred_element_type=jnp.float32)  # (C, tp) f32
    z2 = z * z
    u1 = z[:, :_LANE]
    u2 = z2[:, :_LANE]
    for j in range(1, z.shape[1] // _LANE):
        u1 = u1 + z[:, j * _LANE:(j + 1) * _LANE]
        u2 = u2 + z2[:, j * _LANE:(j + 1) * _LANE]
    u1_ref[0] = u1                                                  # per-tile partials,
    u2_ref[0] = u2                                                  # no cross-step carry
    y_ref[0] = z.astype(y_ref.dtype)                                # lane-dense store


# --------------------------- tiled path, pass 2 (normalize) --------------------- #

def _gn_apply_kernel(y_ref, scale_ref, shift_ref, o_ref):
    # y_ref/o_ref: (1, C, tp2); scale/shift: (1, C, 1) folded (bias + GroupNorm) affine
    y = y_ref[0].astype(jnp.float32)
    o_ref[0] = (y * scale_ref[0] + shift_ref[0]).astype(o_ref.dtype)


# ----------------------------------- wrapper ------------------------------------ #

def depthwise_conv_layer(x, conv_w, conv_b, gn_w, gn_b, r, *,
                         compute_dtype=jnp.bfloat16, tile_p=None):
    """x: (N, C_in, D, H, W); conv_w: (C_out, C_in, r, r, r).
    Returns GroupNorm(1)(Conv3d(stride=r, kernel=r)(x)) as (N, C_out, D//r, H//r, W//r).
    Matmul operands use `compute_dtype` (bf16 default); stats/normalisation stay f32."""
    N, C_in, D, H, W = x.shape
    C_out = conv_w.shape[0]
    Do, Ho, Wo = D // r, H // r, W // r
    x = x[:, :, :Do * r, :Ho * r, :Wo * r]        # Conv3d floor behaviour
    P = Do * Ho * Wo
    K = C_in * r * r * r

    vmem_limit, tile_budget = _vmem_budgets()

    # --- glue: patch extraction directly in the transposed (K, P) layout the kernel
    # wants (lane dim = P).  See TODO at top of file about folding this into pass 1.
    xp = x.reshape(N, C_in, Do, r, Ho, r, Wo, r).transpose(0, 1, 3, 5, 7, 2, 4, 6)
    A = xp.reshape(N, K, P).astype(compute_dtype)
    Wm = conv_w.reshape(C_out, K).astype(compute_dtype)

    a_item = jnp.dtype(compute_dtype).itemsize
    y_item = a_item
    out_item = jnp.dtype(x.dtype).itemsize
    inv_n = 1.0 / float(P * C_out)

    # ---------------- fused single-tile path (small P) ----------------
    P128 = _ceil_to(P, _LANE)
    fused_bytes = (2 * K * P128 * a_item           # A block, double-buffered
                   + 2 * C_out * P128 * out_item   # out block, double-buffered
                   + 2 * K * C_out * a_item        # weight (TODO(synk): pl.Buffered(1))
                   + 6 * C_out * 4)                # bias / gamma / beta
    if tile_p is None and fused_bytes <= tile_budget:
        if P128 != P:
            A = jnp.pad(A, ((0, 0), (0, 0), (0, P128 - P)))   # lane-dense output store
        b2 = conv_b.reshape(C_out, 1).astype(jnp.float32)
        g2 = gn_w.reshape(C_out, 1).astype(jnp.float32)
        beta2 = gn_b.reshape(C_out, 1).astype(jnp.float32)
        # TODO(synk): N == 1 keeps one v7x TensorCore idle here; the tiled path below
        # parallelises over P instead.
        out = pl.pallas_call(
            functools.partial(_fused_kernel, p_real=float(P), inv_n=inv_n),
            out_shape=jax.ShapeDtypeStruct((N, C_out, P128), x.dtype),
            grid_spec=pltpu.PrefetchScalarGridSpec(
                num_scalar_prefetch=0,
                grid=(N,),
                in_specs=[
                    pl.BlockSpec((1, K, P128), lambda n: (n, 0, 0)),
                    pl.BlockSpec((C_out, K), lambda n: (0, 0)),
                    pl.BlockSpec((C_out, 1), lambda n: (0, 0)),
                    pl.BlockSpec((C_out, 1), lambda n: (0, 0)),
                    pl.BlockSpec((C_out, 1), lambda n: (0, 0)),
                ],
                out_specs=pl.BlockSpec((1, C_out, P128), lambda n: (n, 0, 0)),
            ),
            compiler_params=pltpu.CompilerParams(
                dimension_semantics=("parallel",),
                vmem_limit_bytes=vmem_limit),
        )(A, Wm, b2, g2, beta2)
        if P128 != P:
            out = out[:, :, :P]
        return out.reshape(N, C_out, Do, Ho, Wo)

    # ---------------- tiled two-pass path (large P) ----------------
    if tile_p is None:
        per_p = 2 * (K * a_item + C_out * y_item)          # dbl-buffered A + y blocks
        fixed = 2 * K * C_out * a_item + 8 * C_out * _LANE * 4
        tile_p, P_pad = _choose_tile_p(P, max(_LANE, (tile_budget - fixed) // per_p))
    else:
        assert tile_p % _LANE == 0, tile_p
        P_pad = _ceil_to(P, tile_p)
    num_pt = P_pad // tile_p
    if P_pad != P:
        A = jnp.pad(A, ((0, 0), (0, 0), (0, P_pad - P)))

    y, u1, u2 = pl.pallas_call(
        _conv_stats_kernel,
        out_shape=(
            jax.ShapeDtypeStruct((N, C_out, P_pad), compute_dtype),
            jax.ShapeDtypeStruct((N * num_pt, C_out, _LANE), jnp.float32),
            jax.ShapeDtypeStruct((N * num_pt, C_out, _LANE), jnp.float32),
        ),
        grid_spec=pltpu.PrefetchScalarGridSpec(
            num_scalar_prefetch=0,
            grid=(N, num_pt),
            in_specs=[
                pl.BlockSpec((1, K, tile_p), lambda n, p: (n, 0, p)),
                pl.BlockSpec((C_out, K), lambda n, p: (0, 0)),
            ],
            out_specs=[
                pl.BlockSpec((1, C_out, tile_p), lambda n, p: (n, 0, p)),
                pl.BlockSpec((1, C_out, _LANE), lambda n, p: (n * num_pt + p, 0, 0)),
                pl.BlockSpec((1, C_out, _LANE), lambda n, p: (n * num_pt + p, 0, 0)),
            ],
        ),
        compiler_params=pltpu.CompilerParams(
            # Per-tile partial moments -> no cross-step carry, so BOTH axes are
            # parallel and v7x megacore is used even when N == 1.
            dimension_semantics=("parallel", "parallel"),
            vmem_limit_bytes=vmem_limit),
    )(A, Wm)

    # tiny per-sample stats (O(N*C_out) work) in plain JAX; bias folded analytically,
    # zero-padded columns contribute exactly nothing.
    cb = conv_b.astype(jnp.float32)
    u1c = jnp.sum(u1.reshape(N, num_pt, C_out, _LANE), axis=(1, 3))   # (N, C) sum_p z
    u2c = jnp.sum(u2.reshape(N, num_pt, C_out, _LANE), axis=(1, 3))   # (N, C) sum_p z^2
    mean = (jnp.sum(u1c, axis=1) + P * jnp.sum(cb)) * inv_n           # (N,)
    d = cb[None, :] - mean[:, None]                                   # (N, C)
    var = jnp.sum(u2c + 2.0 * d * u1c + P * d * d, axis=1) * inv_n    # (N,) bias-shifted
    inv_std = jax.lax.rsqrt(var + EPS)
    scale = (inv_std[:, None] * gn_w[None, :].astype(jnp.float32)).reshape(N, C_out, 1)
    shift = (d * inv_std[:, None] * gn_w[None, :].astype(jnp.float32)
             + gn_b[None, :].astype(jnp.float32)).reshape(N, C_out, 1)

    # pass 2 is pure elementwise -> give it its own, much larger lane tile
    per_p2 = 2 * C_out * (y_item + out_item)
    max_tp2 = max(tile_p, tile_budget // max(per_p2, 1))
    best, dd = 1, 1
    while dd * dd <= num_pt:
        if num_pt % dd == 0:
            for c in (dd, num_pt // dd):
                if c * tile_p <= max_tp2 and c > best:
                    best = c
        dd += 1
    tile_p2 = best * tile_p
    num_pt2 = P_pad // tile_p2

    out = pl.pallas_call(
        _gn_apply_kernel,
        out_shape=jax.ShapeDtypeStruct((N, C_out, P_pad), x.dtype),
        grid_spec=pltpu.PrefetchScalarGridSpec(
            num_scalar_prefetch=0,
            grid=(N, num_pt2),
            in_specs=[
                pl.BlockSpec((1, C_out, tile_p2), lambda n, p: (n, 0, p)),
                pl.BlockSpec((1, C_out, 1), lambda n, p: (n, 0, 0)),
                pl.BlockSpec((1, C_out, 1), lambda n, p: (n, 0, 0)),
            ],
            out_specs=pl.BlockSpec((1, C_out, tile_p2), lambda n, p: (n, 0, p)),
        ),
        compiler_params=pltpu.CompilerParams(
            dimension_semantics=("parallel", "parallel"),
            vmem_limit_bytes=vmem_limit),
    )(y, scale, shift)

    if P_pad != P:
        out = out[:, :, :P]
    return out.reshape(N, C_out, Do, Ho, Wo)


def _reference(x, conv_w, conv_b, gn_w, gn_b, r):
    """Plain-JAX reference (lax conv + group norm) for verification."""
    y = jax.lax.conv_general_dilated(
        x, conv_w, window_strides=(r, r, r), padding="VALID",
        dimension_numbers=("NCDHW", "OIDHW", "NCDHW"))
    y = y + conv_b.reshape(1, -1, 1, 1, 1)
    mean = jnp.mean(y, axis=(1, 2, 3, 4), keepdims=True)
    var = jnp.mean((y - mean) ** 2, axis=(1, 2, 3, 4), keepdims=True)
    y = (y - mean) * jax.lax.rsqrt(var + EPS)
    return y * gn_w.reshape(1, -1, 1, 1, 1) + gn_b.reshape(1, -1, 1, 1, 1)


if __name__ == "__main__":
    key = jax.random.PRNGKey(0)
    k_x, k_w, k_b, k_g, k_beta, k_x2 = jax.random.split(key, 6)

    N, C_in, C_out, r = 2, 4, 8, 2
    conv_w = jax.random.normal(k_w, (C_out, C_in, r, r, r), dtype=jnp.float32) * 0.1
    conv_b = jax.random.normal(k_b, (C_out,), dtype=jnp.float32) * 0.1
    gn_w = 1.0 + 0.1 * jax.random.normal(k_g, (C_out,), dtype=jnp.float32)
    gn_b = 0.1 * jax.random.normal(k_beta, (C_out,), dtype=jnp.float32)

    # case 1: small volume -> fused single-tile path (P = 64, padded to 128 lanes)
    D = H = W = 8
    x = jax.random.normal(k_x, (N, C_in, D, H, W), dtype=jnp.float32)
    ref = _reference(x, conv_w, conv_b, gn_w, gn_b, r)
    out = jax.block_until_ready(
        depthwise_conv_layer(x, conv_w, conv_b, gn_w, gn_b, r, compute_dtype=jnp.float32))
    assert out.shape == (N, C_out, D // r, H // r, W // r)
    assert jnp.allclose(out, ref, atol=1e-4, rtol=1e-4), "fused f32 path mismatch"
    out_bf = jax.block_until_ready(
        depthwise_conv_layer(x, conv_w, conv_b, gn_w, gn_b, r))      # default bf16 MXU
    assert jnp.allclose(out_bf, ref, atol=6e-2, rtol=6e-2), "fused bf16 path mismatch"

    # case 2: larger volume with forced P-tiling -> two-pass path (P = 512, tile_p = 128)
    D2 = H2 = W2 = 16
    x2 = jax.random.normal(k_x2, (N, C_in, D2, H2, W2), dtype=jnp.float32)
    ref2 = _reference(x2, conv_w, conv_b, gn_w, gn_b, r)
    out2 = jax.block_until_ready(
        depthwise_conv_layer(x2, conv_w, conv_b, gn_w, gn_b, r,
                             compute_dtype=jnp.float32, tile_p=128))
    assert out2.shape == (N, C_out, D2 // r, H2 // r, W2 // r)
    assert jnp.allclose(out2, ref2, atol=1e-4, rtol=1e-4), "tiled f32 path mismatch"
    out2_bf = jax.block_until_ready(
        depthwise_conv_layer(x2, conv_w, conv_b, gn_w, gn_b, r, tile_p=128))
    assert jnp.allclose(out2_bf, ref2, atol=6e-2, rtol=6e-2), "tiled bf16 path mismatch"

    # case 3: tiled path with a tile that does NOT divide P (exercises zero-padded tail)
    out3 = jax.block_until_ready(
        depthwise_conv_layer(x2, conv_w, conv_b, gn_w, gn_b, r,
                             compute_dtype=jnp.float32, tile_p=384))
    assert jnp.allclose(out3, ref2, atol=1e-4, rtol=1e-4), "padded-tail tiled path mismatch"

    print("KERNEL_OK")
</pallas_src>

<mosaic_0001>
module attributes {stable_mosaic.version = 11 : i64} {
  func.func @_fused_kernel(%arg0: i32, %arg1: memref<1x32x128xf32, #tpu.memory_space<vmem>>, %arg2: memref<8x32xf32, #tpu.memory_space<vmem>>, %arg3: memref<8x1xf32, #tpu.memory_space<vmem>>, %arg4: memref<8x1xf32, #tpu.memory_space<vmem>>, %arg5: memref<8x1xf32, #tpu.memory_space<vmem>>, %arg6: memref<1x8x128xf32, #tpu.memory_space<vmem>>) attributes {dimension_semantics = [#tpu.dimension_semantics<parallel>], iteration_bounds = array<i64: 2>, scalar_prefetch = 0 : i64, scratch_operands = 0 : i64, tpu.core_type = #tpu.core_type<tc>, window_params = [{transform_indices = @transform_0, window_bounds = array<i64: 1, 32, 128>}, {pipeline_mode = #tpu.pipeline_mode<synchronous>, transform_indices = @transform_1, window_bounds = array<i64: 8, 32>}, {pipeline_mode = #tpu.pipeline_mode<synchronous>, transform_indices = @transform_2, window_bounds = array<i64: 8, 1>}, {pipeline_mode = #tpu.pipeline_mode<synchronous>, transform_indices = @transform_3, window_bounds = array<i64: 8, 1>}, {pipeline_mode = #tpu.pipeline_mode<synchronous>, transform_indices = @transform_4, window_bounds = array<i64: 8, 1>}, {transform_indices = @transform_5, window_bounds = array<i64: 1, 8, 128>}]} {
    %c0 = arith.constant 0 : index
    %c0_0 = arith.constant 0 : index
    %c0_1 = arith.constant 0 : index
    %0 = vector.load %arg1[%c0, %c0_0, %c0_1] : memref<1x32x128xf32, #tpu.memory_space<vmem>>, vector<1x32x128xf32>
    %1 = vector.shape_cast %0 : vector<1x32x128xf32> to vector<32x128xf32>
    %c0_2 = arith.constant 0 : index
    %c0_3 = arith.constant 0 : index
    %2 = vector.load %arg2[%c0_2, %c0_3] : memref<8x32xf32, #tpu.memory_space<vmem>>, vector<8x32xf32>
    %cst = arith.constant dense<0.000000e+00> : vector<8x128xf32>
    %3 = tpu.matmul %2, %1, %cst {dimension_numbers = #tpu.dot_dimension_numbers<[1], [0], [0], [1], [0, 0, 1, 1], [], []>} : vector<8x32xf32>, vector<32x128xf32>, vector<8x128xf32> -> vector<8x128xf32>
    %4 = arith.mulf %3, %3 : vector<8x128xf32>
    %c0_4 = arith.constant 0 : index
    %c0_5 = arith.constant 0 : index
    %5 = vector.load %arg3[%c0_4, %c0_5] : memref<8x1xf32, #tpu.memory_space<vmem>>, vector<8x1xf32>
    %cst_6 = arith.constant dense<0.000000e+00> : vector<8xf32>
    %6 = vector.multi_reduction <add>, %3, %cst_6 [1] : vector<8x128xf32> to vector<8xf32>
    %7 = vector.shape_cast %6 : vector<8xf32> to vector<8x1xf32>
    %cst_7 = arith.constant dense<0.000000e+00> : vector<8xf32>
    %8 = vector.multi_reduction <add>, %4, %cst_7 [1] : vector<8x128xf32> to vector<8xf32>
    %9 = vector.shape_cast %8 : vector<8xf32> to vector<8x1xf32>
    %10 = vector.shape_cast %7 : vector<8x1xf32> to vector<1x8x1xf32>
    %cst_8 = arith.constant dense<0.000000e+00> : vector<1xf32>
    %11 = vector.multi_reduction <add>, %10, %cst_8 [1, 2] : vector<1x8x1xf32> to vector<1xf32>
    %12 = vector.shape_cast %11 : vector<1xf32> to vector<1x1x1xf32>
    %13 = vector.extract %12[0, 0, 0] : f32 from vector<1x1x1xf32>
    %14 = vector.shape_cast %5 : vector<8x1xf32> to vector<1x8x1xf32>
    %cst_9 = arith.constant dense<0.000000e+00> : vector<1xf32>
    %15 = vector.multi_reduction <add>, %14, %cst_9 [1, 2] : vector<1x8x1xf32> to vector<1xf32>
    %16 = vector.shape_cast %15 : vector<1xf32> to vector<1x1x1xf32>
    %17 = vector.extract %16[0, 0, 0] : f32 from vector<1x1x1xf32>
    %cst_10 = arith.constant 6.400000e+01 : f32
    %18 = arith.mulf %cst_10, %17 : f32
    %19 = arith.addf %13, %18 : f32
    %cst_11 = arith.constant 0.001953125 : f32
    %20 = arith.mulf %19, %cst_11 : f32
    %21 = vector.broadcast %20 : f32 to vector<8x1xf32>
    %22 = arith.subf %5, %21 : vector<8x1xf32>
    %cst_12 = arith.constant 2.000000e+00 : f32
    %23 = vector.broadcast %cst_12 : f32 to vector<8x1xf32>
    %24 = arith.mulf %23, %22 : vector<8x1xf32>
    %25 = arith.mulf %24, %7 : vector<8x1xf32>
    %26 = arith.addf %9, %25 : vector<8x1xf32>
    %cst_13 = arith.constant 6.400000e+01 : f32
    %27 = vector.broadcast %cst_13 : f32 to vector<8x1xf32>
    %28 = arith.mulf %27, %22 : vector<8x1xf32>
    %29 = arith.mulf %28, %22 : vector<8x1xf32>
    %30 = arith.addf %26, %29 : vector<8x1xf32>
    %31 = vector.shape_cast %30 : vector<8x1xf32> to vector<1x8x1xf32>
    %cst_14 = arith.constant dense<0.000000e+00> : vector<1xf32>
    %32 = vector.multi_reduction <add>, %31, %cst_14 [1, 2] : vector<1x8x1xf32> to vector<1xf32>
    %33 = vector.shape_cast %32 : vector<1xf32> to vector<1x1x1xf32>
    %34 = vector.extract %33[0, 0, 0] : f32 from vector<1x1x1xf32>
    %cst_15 = arith.constant 0.001953125 : f32
    %35 = arith.mulf %34, %cst_15 : f32
    %cst_16 = arith.constant 9.99999974E-6 : f32
    %36 = arith.addf %35, %cst_16 : f32
    %37 = math.rsqrt %36 : f32
    %c0_17 = arith.constant 0 : index
    %c0_18 = arith.constant 0 : index
    %38 = vector.load %arg4[%c0_17, %c0_18] : memref<8x1xf32, #tpu.memory_space<vmem>>, vector<8x1xf32>
    %39 = vector.broadcast %37 : f32 to vector<8x1xf32>
    %40 = arith.mulf %39, %38 : vector<8x1xf32>
    %41 = arith.mulf %22, %40 : vector<8x1xf32>
    %c0_19 = arith.constant 0 : index
    %c0_20 = arith.constant 0 : index
    %42 = vector.load %arg5[%c0_19, %c0_20] : memref<8x1xf32, #tpu.memory_space<vmem>>, vector<8x1xf32>
    %43 = arith.addf %41, %42 : vector<8x1xf32>
    %44 = vector.broadcast %40 : vector<8x1xf32> to vector<8x128xf32>
    %45 = arith.mulf %3, %44 : vector<8x128xf32>
    %46 = vector.broadcast %43 : vector<8x1xf32> to vector<8x128xf32>
    %47 = arith.addf %45, %46 : vector<8x128xf32>
    %c0_21 = arith.constant 0 : index
    %c0_22 = arith.constant 0 : index
    %c0_23 = arith.constant 0 : index
    %48 = vector.load %arg6[%c0_21, %c0_22, %c0_23] : memref<1x8x128xf32, #tpu.memory_space<vmem>>, vector<1x8x128xf32>
    %49 = vector.shape_cast %48 : vector<1x8x128xf32> to vector<8x128xf32>
    %50 = vector.shape_cast %47 : vector<8x128xf32> to vector<1x8x128xf32>
    tpu.vector_store %arg6[%c0_21, %c0_22, %c0_23], %50 {strides = array<i32>} : memref<1x8x128xf32, #tpu.memory_space<vmem>>, vector<1x8x128xf32>,
    return
  }
  func.func @transform_0(%arg0: i32) -> (i32, i32, i32) {
    %c0_i32 = arith.constant 0 : i32
    %c0_i32_0 = arith.constant 0 : i32
    %c0_i32_1 = arith.constant 0 : i32
    return %arg0, %c0_i32, %c0_i32_0 : i32, i32, i32
  }
  func.func @transform_1(%arg0: i32) -> (i32, i32) {
    %c0_i32 = arith.constant 0 : i32
    %c0_i32_0 = arith.constant 0 : i32
    %c0_i32_1 = arith.constant 0 : i32
    return %c0_i32, %c0_i32_0 : i32, i32
  }
  func.func @transform_2(%arg0: i32) -> (i32, i32) {
    %c0_i32 = arith.constant 0 : i32
    %c0_i32_0 = arith.constant 0 : i32
    %c0_i32_1 = arith.constant 0 : i32
    return %c0_i32, %c0_i32_0 : i32, i32
  }
  func.func @transform_3(%arg0: i32) -> (i32, i32) {
    %c0_i32 = arith.constant 0 : i32
    %c0_i32_0 = arith.constant 0 : i32
    %c0_i32_1 = arith.constant 0 : i32
    return %c0_i32, %c0_i32_0 : i32, i32
  }
  func.func @transform_4(%arg0: i32) -> (i32, i32) {
    %c0_i32 = arith.constant 0 : i32
    %c0_i32_0 = arith.constant 0 : i32
    %c0_i32_1 = arith.constant 0 : i32
    return %c0_i32, %c0_i32_0 : i32, i32
  }
  func.func @transform_5(%arg0: i32) -> (i32, i32, i32) {
    %c0_i32 = arith.constant 0 : i32
    %c0_i32_0 = arith.constant 0 : i32
    %c0_i32_1 = arith.constant 0 : i32
    return %arg0, %c0_i32, %c0_i32_0 : i32, i32, i32
  }
}

</mosaic_0001>

<llo_original>
// kernel: tpu_custom_call.1
$region0: #{tpu_custom_call.1}
  #allocation0 [shape = 'u32[]', space=smem, size = 0x4, offset = 0x4, fixed_abs, tag = 'smem constant byte address 0x4 - core index']
  #allocation1 [shape = 'u32[72,128]{1,0:T(1,128)}', space=vmem, size = 0x9000, scoped, tag = 'internal scratch']
  %s0 = inlined_call_operand.hbm [shape: f32[2,32,128], index: 0, kind: input, shape index: {}]
  %s1 = inlined_call_operand.vmem [shape: f32[8,32], index: 1, kind: input, shape index: {}]
  %s2 = inlined_call_operand.vmem [shape: f32[8,1], index: 2, kind: input, shape index: {}]
  %s3 = inlined_call_operand.vmem [shape: f32[8,1], index: 3, kind: input, shape index: {}]
  %s4 = inlined_call_operand.vmem [shape: f32[8,1], index: 4, kind: input, shape index: {}]
  %s5 = inlined_call_operand.hbm [shape: f32[2,8,128], index: 5, kind: output, shape index: {}]
  %s6 = sld [smem:[#allocation0]]
  $region57: #{tpu_custom_call.1} parent=0
    _
  %s8 = ssub.s32 1, %s6
  %s9 = scalar_select 0, %s8, %s6
  $region1: #{tpu_custom_call.1} parent=0
    #allocation2 [shape = 'u8[32768]{0}', space=vmem, size = 0x8000, scoped, tag = 'input window, operand 0']
    #allocation3 [shape = 's32[2]{0}', space=sflag, size = 0x8, scoped, tag = 'scoped memory for tpu_custom_call.1']
    #allocation4 [shape = 's32[2]{0}', space=sflag, size = 0x8, scoped, tag = 'scoped memory for tpu_custom_call.1']
    #allocation5 [shape = 'u8[8192]{0}', space=vmem, size = 0x2000, scoped, tag = 'output window, operand 0']
    %10 = vsyncpa [#allocation3], 0
    %s11 = scalar_lea.sflag [#allocation3], 1
    %12 = vsyncpa %s11, 0
    %13 = vsyncpa [#allocation4], 0
    %s14 = scalar_lea.sflag [#allocation4], 1
    %15 = vsyncpa %s14, 0
    loop: start=0, step=1, limit=4
    $region2: #{tpu_custom_call.1} parent=1 // loop_pre_header
      _
    $region3: #{tpu_custom_call.1} parent=1 // loop_header
      %s17 = sphi 0, %s21
      %p18 = scmp.ge.s32.totalorder %s17, 4
      %s27 = sphi 0, %s29
      %s30 = sphi 0, %s27
      %s31 = sphi 0, %s30
      %s47 = sphi 0, %s31
      %s51 = sphi 0, %s51
      %s53 = sphi 0, %s51
      %s54 = sphi 0, %s53
      %s68 = sphi 0, %s54
      %s72 = sphi 0, %s72
      %s74 = sphi 0, %s72
      %s75 = sphi 0, %s74
      %s89 = sphi 0, %s75
      %s93 = sphi 0, %s93
      %s95 = sphi 0, %s93
      %s96 = sphi 0, %s95
      %s110 = sphi 0, %s96
      %s114 = sphi 0, %s114
      %s116 = sphi 0, %s114
      %s117 = sphi 0, %s116
      %s131 = sphi 0, %s117
      %s137 = sphi 0, %s139
      %s140 = sphi 0, %s137
      %s141 = sphi 0, %s140
      %s157 = sphi 0, %s141
    $region4: #{tpu_custom_call.1} parent=1 // loop_header_branch
      %20 = sbr.rel (%p18) target = $region8
    $region5: #{tpu_custom_call.1} parent=1 // loop_body
      %s22 = ssub.s32 %s17, 1
      %s23 = ssub.s32 %s17, 2
      %s24 = sadd.s32 %s17, 1
      %s25 = ssub.s32 %s17, %s24
      %p26 = scmp.eq.s32.totalorder %s25, 0
      %s28 = sadd.s32 %s27, 1
      %s29 = scalar_select %p26, %s27, %s28
      %p32 = pneg %p26
      %p33 = scmp.eq.s32.totalorder %s17, 1
      %p34 = por %p32, %p33
      %p35 = scmp.ne.s32.totalorder %s27, %s30
      %p36 = scmp.eq.s32.totalorder %s17, 0
      %p37 = por %p35, %p36
      %p38 = scmp.ne.s32.totalorder %s27, %s30
      %p39 = scmp.eq.s32.totalorder %s22, 1
      %p40 = por %p38, %p39
      %p41 = scmp.ne.s32.totalorder %s30, %s31
      %p42 = scmp.eq.s32.totalorder %s22, 0
      %p43 = por %p41, %p42
      %p44 = scmp.ne.s32.totalorder %s30, %s31
      %p45 = scmp.eq.s32.totalorder %s23, 1
      %p46 = por %p44, %p45
      %p48 = scmp.ne.s32.totalorder %s31, %s47
      %p49 = scmp.eq.s32.totalorder %s23, 0
      %p50 = por %p48, %p49
      %s52 = sadd.s32 %s51, 1
      %p55 = scmp.eq.s32.totalorder %s17, 1
      %p56 = scmp.ne.s32.totalorder %s51, %s53
      %p57 = scmp.eq.s32.totalorder %s17, 0
      %p58 = por %p56, %p57
      %p59 = scmp.ne.s32.totalorder %s51, %s53
      %p60 = scmp.eq.s32.totalorder %s22, 1
      %p61 = por %p59, %p60
      %p62 = scmp.ne.s32.totalorder %s53, %s54
      %p63 = scmp.eq.s32.totalorder %s22, 0
      %p64 = por %p62, %p63
      %p65 = scmp.ne.s32.totalorder %s53, %s54
      %p66 = scmp.eq.s32.totalorder %s23, 1
      %p67 = por %p65, %p66
      %p69 = scmp.ne.s32.totalorder %s54, %s68
      %p70 = scmp.eq.s32.totalorder %s23, 0
      %p71 = por %p69, %p70
      %s73 = sadd.s32 %s72, 1
      %p76 = scmp.eq.s32.totalorder %s17, 1
      %p77 = scmp.ne.s32.totalorder %s72, %s74
      %p78 = scmp.eq.s32.totalorder %s17, 0
      %p79 = por %p77, %p78
      %p80 = scmp.ne.s32.totalorder %s72, %s74
      %p81 = scmp.eq.s32.totalorder %s22, 1
      %p82 = por %p80, %p81
      %p83 = scmp.ne.s32.totalorder %s74, %s75
      %p84 = scmp.eq.s32.totalorder %s22, 0
      %p85 = por %p83, %p84
      %p86 = scmp.ne.s32.totalorder %s74, %s75
      %p87 = scmp.eq.s32.totalorder %s23, 1
      %p88 = por %p86, %p87
      %p90 = scmp.ne.s32.totalorder %s75, %s89
      %p91 = scmp.eq.s32.totalorder %s23, 0
      %p92 = por %p90, %p91
      %s94 = sadd.s32 %s93, 1
      %p97 = scmp.eq.s32.totalorder %s17, 1
      %p98 = scmp.ne.s32.totalorder %s93, %s95
      %p99 = scmp.eq.s32.totalorder %s17, 0
      %p100 = por %p98, %p99
      %p101 = scmp.ne.s32.totalorder %s93, %s95
      %p102 = scmp.eq.s32.totalorder %s22, 1
      %p103 = por %p101, %p102
      %p104 = scmp.ne.s32.totalorder %s95, %s96
      %p105 = scmp.eq.s32.totalorder %s22, 0
      %p106 = por %p104, %p105
      %p107 = scmp.ne.s32.totalorder %s95, %s96
      %p108 = scmp.eq.s32.totalorder %s23, 1
      %p109 = por %p107, %p108
      %p111 = scmp.ne.s32.totalorder %s96, %s110
      %p112 = scmp.eq.s32.totalorder %s23, 0
      %p113 = por %p111, %p112
      %s115 = sadd.s32 %s114, 1
      %p118 = scmp.eq.s32.totalorder %s17, 1
      %p119 = scmp.ne.s32.totalorder %s114, %s116
      %p120 = scmp.eq.s32.totalorder %s17, 0
      %p121 = por %p119, %p120
      %p122 = scmp.ne.s32.totalorder %s114, %s116
      %p123 = scmp.eq.s32.totalorder %s22, 1
      %p124 = por %p122, %p123
      %p125 = scmp.ne.s32.totalorder %s116, %s117
      %p126 = scmp.eq.s32.totalorder %s22, 0
      %p127 = por %p125, %p126
      %p128 = scmp.ne.s32.totalorder %s116, %s117
      %p129 = scmp.eq.s32.totalorder %s23, 1
      %p130 = por %p128, %p129
      %p132 = scmp.ne.s32.totalorder %s117, %s131
      %p133 = scmp.eq.s32.totalorder %s23, 0
      %p134 = por %p132, %p133
      %s135 = ssub.s32 %s17, %s24
      %p136 = scmp.eq.s32.totalorder %s135, 0
      %s138 = sadd.s32 %s137, 1
      %s139 = scalar_select %p136, %s137, %s138
      %p142 = pneg %p136
      %p143 = scmp.eq.s32.totalorder %s17, 1
      %p144 = por %p142, %p143
      %p145 = scmp.ne.s32.totalorder %s137, %s140
      %p146 = scmp.eq.s32.totalorder %s17, 0
      %p147 = por %p145, %p146
      %p148 = scmp.ne.s32.totalorder %s137, %s140
      %p149 = scmp.eq.s32.totalorder %s22, 1
      %p150 = por %p148, %p149
      %p151 = scmp.ne.s32.totalorder %s140, %s141
      %p152 = scmp.eq.s32.totalorder %s22, 0
      %p153 = por %p151, %p152
      %p154 = scmp.ne.s32.totalorder %s140, %s141
      %p155 = scmp.eq.s32.totalorder %s23, 1
      %p156 = por %p154, %p155
      %p158 = scmp.ne.s32.totalorder %s141, %s157
      %p159 = scmp.eq.s32.totalorder %s23, 0
      %p160 = por %p158, %p159
      %p161 = scmp.le.s32.totalorder 1, %s17
      %p162 = scmp.lt.s32.totalorder %s17, 3
      %p163 = pnand %p161, %p162
      %p164 = pneg %p163
      // Predicated region
      $region9: #{tpu_custom_call.1} parent=5 // pred_check
        _
      $region10: #{tpu_custom_call.1} parent=5 // pred_check_branch
        %166 = sbr.rel (%p163) target = $region12
      $region11: #{tpu_custom_call.1} parent=5 // pred_region
        %s167 = ssub.s32 %s17, 1
        // Predicated region
        $region13: #{tpu_custom_call.1} parent=11 // pred_check
          %p168 = pneg %p64
        $region14: #{tpu_custom_call.1} parent=11 // pred_check_branch
          %170 = sbr.rel (%p168) target = $region16
        $region15: #{tpu_custom_call.1} parent=11 // pred_region
          _
        $region16: #{tpu_custom_call.1} parent=11 // pred_fallthru
          _
        // Predicated region
        $region17: #{tpu_custom_call.1} parent=11 // pred_check
          %p171 = pneg %p85
        $region18: #{tpu_custom_call.1} parent=11 // pred_check_branch
          %173 = sbr.rel (%p171) target = $region20
        $region19: #{tpu_custom_call.1} parent=11 // pred_region
          _
        $region20: #{tpu_custom_call.1} parent=11 // pred_fallthru
          _
        // Predicated region
        $region21: #{tpu_custom_call.1} parent=11 // pred_check
          %p174 = pneg %p106
        $region22: #{tpu_custom_call.1} parent=11 // pred_check_branch
          %176 = sbr.rel (%p174) target = $region24
        $region23: #{tpu_custom_call.1} parent=11 // pred_region
          _
        $region24: #{tpu_custom_call.1} parent=11 // pred_fallthru
          _
        // Predicated region
        $region25: #{tpu_custom_call.1} parent=11 // pred_check
          %p177 = pneg %p127
        $region26: #{tpu_custom_call.1} parent=11 // pred_check_branch
          %179 = sbr.rel (%p177) target = $region28
        $region27: #{tpu_custom_call.1} parent=11 // pred_region
          _
        $region28: #{tpu_custom_call.1} parent=11 // pred_fallthru
          _
      $region12: #{tpu_custom_call.1} parent=5 // pred_fallthru
        _
      %p180 = scmp.lt.s32.totalorder %s17, 2
      // Predicated region
      $region29: #{tpu_custom_call.1} parent=5 // pred_check
        %p181 = pneg %p180
      $region30: #{tpu_custom_call.1} parent=5 // pred_check_branch
        %183 = sbr.rel (%p181) target = $region32
      $region31: #{tpu_custom_call.1} parent=5 // pred_region
        // Predicated region
        $region33: #{tpu_custom_call.1} parent=31 // pred_check
          %p184 = pneg %p37
        $region34: #{tpu_custom_call.1} parent=31 // pred_check_branch
          %186 = sbr.rel (%p184) target = $region36
        $region35: #{tpu_custom_call.1} parent=31 // pred_region
          %s187 = sand.u32 %s27, 1
          %s188 = scalar_lea.sflag [#allocation3], %s187
          %s189 = sand.u32 %s27, 1
          %s190 = smul.addr %s189, 32
          %s191 = scalar_lea.vmem [#allocation2], %s190
          %193 = vsyncadd %s188, 0
          %s194 = smul.addr %s17, 4
          %s195 = smul.addr %s194, 8
          %s196 = scalar_lea.hbm %s0, %s195
          %s197 = sshll.u32 %s196, 4
          %s198 = int_to_ptr.hbm [resolvable:$true] %s197
          %s199 = sshll.u32 %s191, 4
          %s200 = int_to_ptr.vmem [resolvable:$true] %s199
          %205 = dma.hbm_to_vmem [thread:$0]  %s198, 512, %s200, %s188, 128, 128, 8
        $region36: #{tpu_custom_call.1} parent=31 // pred_fallthru
          _
      $region32: #{tpu_custom_call.1} parent=5 // pred_fallthru
        _
      %p206 = scmp.le.s32.totalorder 1, %s17
      %p207 = scmp.lt.s32.totalorder %s17, 3
      %p208 = pnand %p206, %p207
      %p209 = pneg %p208
      // Predicated region
      $region37: #{tpu_custom_call.1} parent=5 // pred_check
        _
      $region38: #{tpu_custom_call.1} parent=5 // pred_check_branch
        %211 = sbr.rel (%p208) target = $region40
      $region39: #{tpu_custom_call.1} parent=5 // pred_region
        %s212 = ssub.s32 %s17, 1
        %s213 = sand.u32 %s30, 1
        %s214 = scalar_lea.sflag [#allocation3], %s213
        %s215 = sand.u32 %s30, 1
        %s216 = smul.addr %s215, 32
        %s217 = scalar_lea.vmem [#allocation2], %s216
        // Predicated region
        $region41: #{tpu_custom_call.1} parent=39 // pred_check
          %p218 = pneg %p43
        $region42: #{tpu_custom_call.1} parent=39 // pred_check_branch
          %220 = sbr.rel (%p218) target = $region44
        $region43: #{tpu_custom_call.1} parent=39 // pred_region
          %222 = dma.done %s214, 512
        $region44: #{tpu_custom_call.1} parent=39 // pred_fallthru
          _
        %s223 = sand.u32 %s30, 1
        %s224 = scalar_lea.sflag [#allocation3], %s223
        %s225 = sand.u32 %s30, 1
        %s226 = smul.addr %s225, 32
        %s227 = scalar_lea.vmem [#allocation2], %s226
        %p228 = pneg %p43
        %p229 = pneg %p40
        %p230 = pneg %p64
        %p231 = pneg %p61
        %p232 = pneg %p85
        %p233 = pneg %p82
        %p234 = pneg %p106
        %p235 = pneg %p103
        %p236 = pneg %p127
        %p237 = pneg %p124
        %p238 = pneg %p153
        %p239 = pneg %p150
        %s240 = sand.u32 %s140, 1
        %s241 = scalar_lea.sflag [#allocation4], %s240
        %s242 = sand.u32 %s140, 1
        %s243 = smul.addr %s242, 8
        %s244 = scalar_lea.vmem [#allocation5], %s243
        %v245 = vld [vmem:[%s217] sm:$0xff]
        %v246 = vld [vmem:[%s217 + $0x8] sm:$0xff]
        %v247 = vld [vmem:[%s217 + $0x10] sm:$0xff]
        %v248 = vld [vmem:[%s217 + $0x18] sm:$0xff]
        %v249 = vld [vmem:[%s1] sm:$0xff]
        %vm250 = vcmask 261120
        %v252 = vsel %vm250, %v249, 0
        %254 = vmatpush.msra.mxu0 0.0
        %255 = vmatpush.msra.mxu0 0.0
        %256 = vmatpush.msra.mxu0 0.0
        %257 = vmatpush.msra.mxu0 0.0
        %258 = vmatpush.msra.mxu0 0.0
        %259 = vmatpush.msra.mxu0 0.0
        %260 = vmatpush.msra.mxu0 0.0
        %261 = vmatpush.msra.mxu0 0.0
        %262 = vmatpush.msra.mxu0 0.0
        %263 = vmatpush.msra.mxu0 0.0
        %264 = vmatpush.msra.mxu0 0.0
        %265 = vmatpush.msra.mxu0 0.0
        %266 = vmatpush.msra.mxu0 %v248
        %267 = vmatpush.msra.mxu0 %v247
        %268 = vmatpush.msra.mxu0 %v246
        %269 = vmatpush.msra.mxu0 %v245
        %270 = vmatmul.f32.gmra.mxu0 %v252
        %v271 = vpop.f32.mrf.mxu0
        %v272 = vadd.f32 0.0, %v271
        %273 = vdwg.mxu0
        %v274 = vmul.f32 %v272, %v272
        %v275 = vld [vmem:[%s2] sm:$0xff]
        %276 = vadd.xlane.f32.xlu0 %v272
        %v277 = vpop.xlane.xlu0 %276
        %278 = vadd.xlane.f32.xlu0 %v274
        %v279 = vpop.xlane.xlu0 %278
        %vm280 = vcmask 7168
        %v281 = vsel %vm280, %v277, 0.0
        %282 = vadd.xlane.f32.xlu0 %v281
        %v283 = vpop.xlane.xlu0 %282
        %v284 = vrot.slane %v283, 4
        %v285 = vadd.f32 %v283, %v284
        %v286 = vrot.slane %v285, 2
        %v287 = vadd.f32 %v285, %v286
        %v288 = vrot.slane %v287, 1
        %v289 = vadd.f32 %v287, %v288
        %s290 = vtos %v289
        %v291 = vsel %vm280, %v275, 0.0
        %292 = vadd.xlane.f32.xlu0 %v291
        %v293 = vpop.xlane.xlu0 %292
        %v294 = vrot.slane %v293, 4
        %v295 = vadd.f32 %v293, %v294
        %v296 = vrot.slane %v295, 2
        %v297 = vadd.f32 %v295, %v296
        %v298 = vrot.slane %v297, 1
        %v299 = vadd.f32 %v297, %v298
        %s300 = vtos %v299
        %s301 = smul.f32 %s300, 64.0
        %s302 = sadd.f32 %s290, %s301
        %s303 = smul.f32 %s302, 0.001953125
        %v304 = vstv %s303
        %v305 = vsub.f32 %v275, %v304
        %v306 = vmul.f32 %v305, 2.0
        %v307 = vmul.f32 %v306, %v277
        %v308 = vadd.f32 %v279, %v307
        %v309 = vmul.f32 %v305, 64.0
        %v310 = vmul.f32 %v309, %v305
        %v311 = vadd.f32 %v308, %v310
        %v312 = vsel %vm280, %v311, 0.0
        %313 = vadd.xlane.f32.xlu0 %v312
        %v314 = vpop.xlane.xlu0 %313
        %v315 = vrot.slane %v314, 4
        %v316 = vadd.f32 %v314, %v315
        %v317 = vrot.slane %v316, 2
        %v318 = vadd.f32 %v316, %v317
        %v319 = vrot.slane %v318, 1
        %v320 = vadd.f32 %v318, %v319
        %s321 = vtos %v320
        %s322 = smul.f32 %s321, 0.001953125
        %s323 = sadd.f32 %s322, 1e-05
        %v324 = vstv %s323
        %v325 = vrsqrt.pop %v324
        %v326 = vmul.f32 %v325, %v324
        %v327 = vmul.f32 %v326, %v325
        %v328 = vmul.f32 0.5, %v327
        %v329 = vsub.f32 1.5, %v328
        %v330 = vmul.f32 %v325, %v329
        %vm331 = vweird.f32 %v324
        %vm332 = vweird.f32 %v325
        %vm333 = vmor %vm331, %vm332
        %v334 = vsel %vm333, %v325, %v330
        %s335 = vtos %v334
        %v336 = vld [vmem:[%s3] sm:$0xff]
        %v337 = vstv %s335
        %v338 = vmul.f32 %v337, %v336
        %v339 = vmul.f32 %v305, %v338
        %v340 = vld [vmem:[%s4] sm:$0xff]
        %v341 = vadd.f32 %v339, %v340
        %343 = vset.pattern.permute.xlu0 0
        %344 = vperm.xlu0 %343, %v338
        %v345 = vpop.permute.xlu0 %344
        %v347 = vmul.f32 %v272, %v345
        %349 = vset.pattern.permute.xlu0 0
        %350 = vperm.xlu0 %349, %v341
        %v351 = vpop.permute.xlu0 %350
        %v353 = vadd.f32 %v347, %v351
        %354 = vst [vmem:[%s244] sm:$0xff] %v353
        %s355 = sand.u32 %s140, 1
        %s356 = scalar_lea.sflag [#allocation4], %s355
        %s357 = sand.u32 %s140, 1
        %s358 = smul.addr %s357, 8
        %s359 = scalar_lea.vmem [#allocation5], %s358
        // Predicated region
        $region45: #{tpu_custom_call.1} parent=39 // pred_check
          %p360 = pneg %p150
        $region46: #{tpu_custom_call.1} parent=39 // pred_check_branch
          %362 = sbr.rel (%p360) target = $region48
        $region47: #{tpu_custom_call.1} parent=39 // pred_region
          %364 = vsyncadd %s356, 0
          %s365 = smul.addr %s22, 8
          %s366 = scalar_lea.hbm %s5, %s365
          %s368 = sshll.u32 %s359, 4
          %s369 = int_to_ptr.vmem [resolvable:$true] %s368
          %s370 = sshll.u32 %s366, 4
          %s371 = int_to_ptr.hbm [resolvable:$true] %s370
          %373 = dma.vmem_to_hbm [thread:$0]  %s369, 128, %s371, %s356
        $region48: #{tpu_custom_call.1} parent=39 // pred_fallthru
          _
      $region40: #{tpu_custom_call.1} parent=5 // pred_fallthru
        _
      %p374 = scmp.le.s32.totalorder 2, %s17
      // Predicated region
      $region49: #{tpu_custom_call.1} parent=5 // pred_check
        %p375 = pneg %p374
      $region50: #{tpu_custom_call.1} parent=5 // pred_check_branch
        %377 = sbr.rel (%p375) target = $region52
      $region51: #{tpu_custom_call.1} parent=5 // pred_region
        %s378 = ssub.s32 %s17, 2
        // Predicated region
        $region53: #{tpu_custom_call.1} parent=51 // pred_check
          %p379 = pneg %p156
        $region54: #{tpu_custom_call.1} parent=51 // pred_check_branch
          %381 = sbr.rel (%p379) target = $region56
        $region55: #{tpu_custom_call.1} parent=51 // pred_region
          %s382 = sand.u32 %s141, 1
          %s383 = scalar_lea.sflag [#allocation4], %s382
          %s384 = sand.u32 %s141, 1
          %s385 = smul.addr %s384, 8
          %s386 = scalar_lea.vmem [#allocation5], %s385
          %388 = dma.done %s383, 128
        $region56: #{tpu_custom_call.1} parent=51 // pred_fallthru
          _
      $region52: #{tpu_custom_call.1} parent=5 // pred_fallthru
        _
    $region6: #{tpu_custom_call.1} parent=1 // loop_footer
      %s21 = sadd.s32 1, %s17
    $region7: #{tpu_custom_call.1} parent=1 // loop_footer_branch
      %16 = sbr.rel target = $region3
    $region8: #{tpu_custom_call.1} parent=1 // loop_exit
      _
    %389 = vsyncpa [#allocation3], 1
    %s390 = scalar_lea.sflag [#allocation3], 1
    %391 = vsyncpa %s390, 1
    %392 = vsyncpa [#allocation4], 1
    %s393 = scalar_lea.sflag [#allocation4], 1
    %394 = vsyncpa %s393, 1

</llo_original>
